<compile_context>
chip_gen: v7x
topology: tpu7x:2x2x1
jax: 0.10.0
libtpu: 0.0.40
codegen_flags: <defaults>
</compile_context>

<pallas_src>
import functools

import jax
import jax.numpy as jnp
from jax.experimental import pallas as pl
from jax.experimental.pallas import tpu as pltpu


def _round_up(x, m):
    return (x + m - 1) // m * m


@functools.lru_cache(maxsize=None)
def _vmem_limit_bytes():
    """Raise the scoped-VMEM limit (defaults are 16/32 MiB) with headroom."""
    try:
        cap = pltpu.get_tpu_info().vmem_capacity_bytes
    except Exception:  # conservative, valid on v5e/v6e/v7x
        cap = 64 * 1024 * 1024
    return min(int(cap * 3 // 4), 100 * 1024 * 1024)


def _choose_tiles(M, K, N_pad, *, out_bytes, budget, tm_max=1024, tk_max=2048):
    """MXU-friendly tiles obeying the (8,128) layout rules and a VMEM budget."""
    # K: untiled when it fits (enables the no-scratch fast path); otherwise an
    # exact 128-multiple divisor so no garbage ever enters the reduction.
    tk = K
    if K > tk_max:
        tk = 128
        for cand in range(tk_max, 127, -128):
            if K % cand == 0:
                tk = cand
                break
    k_tiled = tk != K

    # N: single block (tn = N_pad) so W/bias are VMEM-resident (DMA'd once)
    # and X is read exactly once; only shrink under extreme VMEM pressure.
    tn = N_pad

    # M: large tiles amortize per-grid-step overhead, but keep >= 2 M blocks
    # when M allows so both TensorCores get work on v7x (M axis is "parallel").
    tm = min(tm_max, _round_up(M, 128))
    if M > 128:
        tm = min(tm, _round_up(-(-M // 2), 128))

    def fits(tm_, tn_):
        acc = tm_ * tn_ * 4 if k_tiled else 0
        return (2 * tm_ * tk * 2        # X, bf16, double-buffered
                + 2 * tk * tn_ * 2      # W, bf16, double-buffered (DMA'd once)
                + 2 * tn_ * 4           # bias
                + 2 * tm_ * tn_ * out_bytes  # Y
                + acc) <= budget

    while not fits(tm, tn):
        if tm > 256:
            tm -= 128
        elif tn > 128:
            cand = tn - 128
            while cand > 128 and N_pad % cand:
                cand -= 128
            tn = cand
        elif tm > 128:
            tm -= 128
        else:
            break
    return tm, tn, tk


def _merge_linear_kernel_fast(x_ref, w_ref, b_ref, o_ref):
    # K untiled: single MXU pass, no scratch accumulator, no init/finalize.
    o_ref[...] = (jnp.dot(x_ref[...], w_ref[...],
                          preferred_element_type=jnp.float32)
                  + b_ref[...]).astype(o_ref.dtype)


def _merge_linear_kernel_ktiled(x_ref, w_ref, b_ref, o_ref, acc_ref):
    # K tiled (rare for PatchMerging): f32 VMEM accumulator, K axis last.
    k = pl.program_id(2)

    @pl.when(k == 0)
    def _():
        acc_ref[...] = jnp.zeros_like(acc_ref)

    acc_ref[...] += jnp.dot(x_ref[...], w_ref[...],
                            preferred_element_type=jnp.float32)

    @pl.when(k == pl.num_programs(2) - 1)
    def _():
        o_ref[...] = (acc_ref[...] + b_ref[...]).astype(o_ref.dtype)


def _pallas_linear(x_flat, w, b, *, N_out, out_dtype):
    """y = (x_flat @ w + b)[:, :N_out] with a tiled Pallas TPU kernel.

    x_flat: (M, K)       (bf16 recommended)
    w:      (K, N_pad)   N_pad a multiple of 128 (zero-padded columns)
    b:      (N_pad,)     float32 (zero-padded)
    """
    M, K = x_flat.shape
    Kw, N_pad = w.shape
    assert K == Kw and N_pad % 128 == 0 and N_out <= N_pad

    out_bytes = jnp.dtype(out_dtype).itemsize
    budget = int(_vmem_limit_bytes() * 0.85)
    tm, tn, tk = _choose_tiles(M, K, N_pad, out_bytes=out_bytes, budget=budget)
    k_tiled = tk != K
    grid = (pl.cdiv(M, tm), N_pad // tn, pl.cdiv(K, tk))

    # When the N grid dim collapsed to one block we emit the ragged (M, N_out)
    # output directly: masked lane stores beat a second full HBM pass.
    ragged_n_ok = (tn == N_pad)
    out_N = N_out if ragged_n_ok else N_pad

    b2d = b.reshape(1, N_pad).astype(jnp.float32)

    kernel = _merge_linear_kernel_ktiled if k_tiled else _merge_linear_kernel_fast
    scratch = [pltpu.VMEM((tm, tn), jnp.float32)] if k_tiled else []

    y = pl.pallas_call(
        kernel,
        out_shape=jax.ShapeDtypeStruct((M, out_N), out_dtype),
        grid_spec=pltpu.PrefetchScalarGridSpec(
            num_scalar_prefetch=0,
            grid=grid,
            in_specs=[
                pl.BlockSpec((tm, tk), lambda i, j, k: (i, k)),
                pl.BlockSpec((tk, tn), lambda i, j, k: (k, j)),
                pl.BlockSpec((1, tn), lambda i, j, k: (0, j)),
            ],
            out_specs=pl.BlockSpec((tm, tn), lambda i, j, k: (i, j)),
            scratch_shapes=scratch,
        ),
        compiler_params=pltpu.CompilerParams(
            dimension_semantics=("parallel", "parallel", "arbitrary"),
            vmem_limit_bytes=_vmem_limit_bytes(),
            # Allow XLA to fuse the layout-only patch rearrange producing
            # x_flat into this call's input pipeline.
            allow_input_fusion=[True, False, False],
        ),
    )(x_flat, w, b2d)

    if out_N != N_out:  # fallback path, only if tn had to shrink below N_pad
        y = y[:, :N_out]
    return y


def patch_merging_forward(x, weight, bias, downscaling_factor, padding=0,
                          *, compute_dtype=jnp.bfloat16, out_dtype=None):
    """JAX/Pallas equivalent of PatchMerging.forward.

    x:      (B, C, H, W) float32, NCHW
    weight: (out_channels, C*df*df)   -- PyTorch nn.Linear weight layout
    bias:   (out_channels,)
    returns (B, H//df, W//df, out_channels) in `out_dtype`
            (defaults to `compute_dtype` = bf16 to halve output HBM traffic;
             pass out_dtype=jnp.float32 for an f32 result).
    """
    df = downscaling_factor
    out_dtype = compute_dtype if out_dtype is None else out_dtype
    if padding:
        x = jnp.pad(x, ((0, 0), (0, 0), (padding, padding), (padding, padding)))
    B, C, H, W = x.shape
    nh, nw = H // df, W // df
    K = C * df * df
    N = weight.shape[0]

    # bf16 activations/weights (f32 MXU accumulation): halves HBM traffic.
    x = x.astype(compute_dtype)
    # Drop incomplete windows (matches nn.Unfold); no-op when df divides H, W.
    x = x[:, :, : nh * df, : nw * df]

    # Unfold(kernel=df, stride=df) + view + permute as pure layout ops:
    # (B, C, H, W) -> (B*nh*nw, C*df*df), unfold feature order (c, ky, kx).
    p = x.reshape(B, C, nh, df, nw, df).transpose(0, 2, 4, 1, 3, 5)
    x_flat = p.reshape(B * nh * nw, K)

    # nn.Linear: y = x @ W.T + b.  Pad output channels once: 128-lane aligned,
    # 256-aligned when N > 128 (full MXU width on v6e/v7x).  The padded
    # columns are stripped by the kernel's ragged-N masked writeback.
    N_pad = 128 if N <= 128 else _round_up(N, 256)
    w_t = weight.T.astype(compute_dtype)            # (K, N)
    b_p = bias.astype(jnp.float32)
    if N_pad != N:
        w_t = jnp.pad(w_t, ((0, 0), (0, N_pad - N)))
        b_p = jnp.pad(b_p, (0, N_pad - N))

    y = _pallas_linear(x_flat, w_t, b_p, N_out=N, out_dtype=out_dtype)
    return y.reshape(B, nh, nw, N)


if __name__ == "__main__":
    # Small deterministic example consistent with the module:
    #   in_channels=4, out_channels=32, downscaling_factor=2, input (2,4,16,16)
    B, C, H, W = 2, 4, 16, 16
    df = 2
    out_channels = 32
    K = C * df * df

    key = jax.random.PRNGKey(0)
    kx, kw, kb = jax.random.split(key, 3)

    x = jax.random.normal(kx, (B, C, H, W), dtype=jnp.float32)
    bound = 1.0 / (K ** 0.5)
    weight = jax.random.uniform(kw, (out_channels, K), jnp.float32, -bound, bound)
    bias = jax.random.uniform(kb, (out_channels,), jnp.float32, -bound, bound)

    # Pure-JAX references: exact f32 math, and a bf16-input / f32-accumulate
    # reference matching the kernel's compute dtype.
    nh, nw = H // df, W // df
    p = x.reshape(B, C, nh, df, nw, df).transpose(0, 2, 4, 1, 3, 5)
    p = p.reshape(B, nh, nw, K)
    y_ref_f32 = p @ weight.T + bias
    y_ref_bf16 = (jnp.dot(p.astype(jnp.bfloat16).reshape(-1, K),
                          weight.T.astype(jnp.bfloat16),
                          preferred_element_type=jnp.float32)
                  + bias).reshape(B, nh, nw, out_channels)

    # Default path: bf16 output (bandwidth-optimal).
    fwd = jax.jit(functools.partial(patch_merging_forward,
                                    downscaling_factor=df))
    y = fwd(x, weight, bias)
    jax.block_until_ready(y)
    assert y.shape == (B, nh, nw, out_channels)
    assert y.dtype == jnp.bfloat16
    assert jnp.allclose(y.astype(jnp.float32), y_ref_f32, atol=5e-2, rtol=5e-2)

    # f32-output path: should match the bf16-input/f32-accumulate reference.
    fwd32 = jax.jit(functools.partial(patch_merging_forward,
                                      downscaling_factor=df,
                                      out_dtype=jnp.float32))
    y32 = fwd32(x, weight, bias)
    jax.block_until_ready(y32)
    assert y32.shape == (B, nh, nw, out_channels)
    assert jnp.allclose(y32, y_ref_bf16, atol=1e-4, rtol=1e-4)
    assert jnp.allclose(y32, y_ref_f32, atol=5e-2, rtol=5e-2)

    print("KERNEL_OK")
</pallas_src>

<mosaic_0001>
module attributes {stable_mosaic.version = 11 : i64} {
  func.func @_merge_linear_kernel_fast(%arg0: i32, %arg1: i32, %arg2: i32, %arg3: memref<128x16xbf16, #tpu.memory_space<vmem>>, %arg4: memref<16x128xbf16, #tpu.memory_space<vmem>>, %arg5: memref<1x128xf32, #tpu.memory_space<vmem>>, %arg6: memref<128x128xbf16, #tpu.memory_space<vmem>>) attributes {dimension_semantics = [#tpu.dimension_semantics<parallel>, #tpu.dimension_semantics<parallel>, #tpu.dimension_semantics<arbitrary>], iteration_bounds = array<i64: 1, 1, 1>, scalar_prefetch = 0 : i64, scratch_operands = 0 : i64, tpu.core_type = #tpu.core_type<tc>, window_params = [{transform_indices = @transform_0, window_bounds = array<i64: 128, 16>}, {transform_indices = @transform_1, window_bounds = array<i64: 16, 128>}, {transform_indices = @transform_2, window_bounds = array<i64: 1, 128>}, {transform_indices = @transform_3, window_bounds = array<i64: 128, 128>}]} {
    %c0 = arith.constant 0 : index
    %c0_0 = arith.constant 0 : index
    %0 = vector.load %arg3[%c0, %c0_0] : memref<128x16xbf16, #tpu.memory_space<vmem>>, vector<128x16xbf16>
    %c0_1 = arith.constant 0 : index
    %c0_2 = arith.constant 0 : index
    %1 = vector.load %arg4[%c0_1, %c0_2] : memref<16x128xbf16, #tpu.memory_space<vmem>>, vector<16x128xbf16>
    %cst = arith.constant dense<0.000000e+00> : vector<128x128xf32>
    %2 = tpu.matmul %0, %1, %cst {dimension_numbers = #tpu.dot_dimension_numbers<[1], [0], [0], [1], [0, 0, 1, 1], [], []>} : vector<128x16xbf16>, vector<16x128xbf16>, vector<128x128xf32> -> vector<128x128xf32>
    %c0_3 = arith.constant 0 : index
    %c0_4 = arith.constant 0 : index
    %3 = vector.load %arg5[%c0_3, %c0_4] : memref<1x128xf32, #tpu.memory_space<vmem>>, vector<1x128xf32>
    %4 = vector.broadcast %3 : vector<1x128xf32> to vector<128x128xf32>
    %5 = arith.addf %2, %4 : vector<128x128xf32>
    %6 = arith.truncf %5 : vector<128x128xf32> to vector<128x128xbf16>
    %c0_5 = arith.constant 0 : index
    %c0_6 = arith.constant 0 : index
    %7 = vector.load %arg6[%c0_5, %c0_6] : memref<128x128xbf16, #tpu.memory_space<vmem>>, vector<128x128xbf16>
    tpu.vector_store %arg6[%c0_5, %c0_6], %6 {strides = array<i32>} : memref<128x128xbf16, #tpu.memory_space<vmem>>, vector<128x128xbf16>,
    return
  }
  func.func @transform_0(%arg0: i32, %arg1: i32, %arg2: i32) -> (i32, i32) {
    %c0_i32 = arith.constant 0 : i32
    return %arg0, %arg2 : i32, i32
  }
  func.func @transform_1(%arg0: i32, %arg1: i32, %arg2: i32) -> (i32, i32) {
    %c0_i32 = arith.constant 0 : i32
    return %arg2, %arg1 : i32, i32
  }
  func.func @transform_2(%arg0: i32, %arg1: i32, %arg2: i32) -> (i32, i32) {
    %c0_i32 = arith.constant 0 : i32
    %c0_i32_0 = arith.constant 0 : i32
    return %c0_i32, %arg1 : i32, i32
  }
  func.func @transform_3(%arg0: i32, %arg1: i32, %arg2: i32) -> (i32, i32) {
    %c0_i32 = arith.constant 0 : i32
    return %arg0, %arg1 : i32, i32
  }
}

</mosaic_0001>

<llo_original>
// kernel: patch_merging_forward.1
$region0: #{patch_merging_forward.1}
  #allocation0 [shape = 'u32[]', space=smem, size = 0x4, offset = 0x4, fixed_abs, tag = 'smem constant byte address 0x4 - core index']
  #allocation1 [shape = 'u32[144,128]{1,0:T(1,128)}', space=vmem, size = 0x12000, scoped, tag = 'internal scratch']
  %s0 = inlined_call_operand.vmem [shape: bf16[128,16], index: 0, kind: input, shape index: {}]
  %s1 = inlined_call_operand.vmem [shape: bf16[16,128], index: 1, kind: input, shape index: {}]
  %s2 = inlined_call_operand.vmem [shape: f32[1,128], index: 2, kind: input, shape index: {}]
  %s3 = inlined_call_operand.hbm [shape: bf16[128,32], index: 3, kind: output, shape index: {}]
  %s4 = sld [smem:[#allocation0]]
  $region22: #{patch_merging_forward.1} parent=0
    _
  %s6 = ssub.s32 1, %s4
  %s7 = scalar_select 0, %s6, %s4
  $region1: #{patch_merging_forward.1} parent=0
    #allocation2 [shape = 'u8[32768]{0}', space=vmem, size = 0x8000, scoped, tag = 'output window, operand 0, single buffered']
    #allocation3 [shape = 's32[1]{0}', space=sflag, size = 0x4, scoped, tag = 'scoped memory for patch_merging_forward.1']
    %8 = vsyncpa [#allocation3], 0
    // Predicated region
    $region2: #{patch_merging_forward.1} parent=1 // pred_check
      _
    $region3: #{patch_merging_forward.1} parent=1 // pred_check_branch
      %10 = sbr.rel (0) target = $region5
    $region4: #{patch_merging_forward.1} parent=1 // pred_region
      _
    $region5: #{patch_merging_forward.1} parent=1 // pred_fallthru
      _
    // Predicated region
    $region6: #{patch_merging_forward.1} parent=1 // pred_check
      _
    $region7: #{patch_merging_forward.1} parent=1 // pred_check_branch
      %12 = sbr.rel (0) target = $region9
    $region8: #{patch_merging_forward.1} parent=1 // pred_region
      _
    $region9: #{patch_merging_forward.1} parent=1 // pred_fallthru
      _
    // Predicated region
    $region10: #{patch_merging_forward.1} parent=1 // pred_check
      _
    $region11: #{patch_merging_forward.1} parent=1 // pred_check_branch
      %14 = sbr.rel (0) target = $region13
    $region12: #{patch_merging_forward.1} parent=1 // pred_region
      _
    $region13: #{patch_merging_forward.1} parent=1 // pred_fallthru
      _
    %v16 = vld [vmem:[%s0] sm:$0xf]
    %v17 = vld [vmem:[%s0 + $0x4] sm:$0xf]
    %v18 = vld [vmem:[%s0 + $0x8] sm:$0xf]
    %v19 = vld [vmem:[%s0 + $0xc] sm:$0xf]
    %v20 = vld [vmem:[%s0 + $0x10] sm:$0xf]
    %v21 = vld [vmem:[%s0 + $0x14] sm:$0xf]
    %v22 = vld [vmem:[%s0 + $0x18] sm:$0xf]
    %v23 = vld [vmem:[%s0 + $0x1c] sm:$0xf]
    %v24 = vld [vmem:[%s0 + $0x20] sm:$0xf]
    %v25 = vld [vmem:[%s0 + $0x24] sm:$0xf]
    %v26 = vld [vmem:[%s0 + $0x28] sm:$0xf]
    %v27 = vld [vmem:[%s0 + $0x2c] sm:$0xf]
    %v28 = vld [vmem:[%s0 + $0x30] sm:$0xf]
    %v29 = vld [vmem:[%s0 + $0x34] sm:$0xf]
    %v30 = vld [vmem:[%s0 + $0x38] sm:$0xf]
    %v31 = vld [vmem:[%s0 + $0x3c] sm:$0xf]
    %v32 = vld [vmem:[%s1] sm:$0xf]
    %v33 = vld [vmem:[%s1 + $0x4] sm:$0xf]
    %v34 = vld [vmem:[%s2] sm:$0x1]
    %v36 = vlaneseq
    %v37 = vshrl.u32 %v36, 7
    %v38 = vsub.s32 0, %v37
    %v39 = vrot.slane %v34, %v38
    %v57 = vunpack.c.l.b16 %v16
    %v58 = vunpack.c.l.b16 %v17
    %v59 = vunpack.c.l.b16 %v18
    %v60 = vunpack.c.l.b16 %v19
    %v61 = vunpack.c.l.b16 %v20
    %v62 = vunpack.c.l.b16 %v21
    %v63 = vunpack.c.l.b16 %v22
    %v64 = vunpack.c.l.b16 %v23
    %v65 = vunpack.c.l.b16 %v24
    %v66 = vunpack.c.l.b16 %v25
    %v67 = vunpack.c.l.b16 %v26
    %v68 = vunpack.c.l.b16 %v27
    %v69 = vunpack.c.l.b16 %v28
    %v70 = vunpack.c.l.b16 %v29
    %v71 = vunpack.c.l.b16 %v30
    %v72 = vunpack.c.l.b16 %v31
    %v73 = vpack.c.b16 %v58, %v57
    %v74 = vpack.c.b16 %v60, %v59
    %v75 = vpack.c.b16 %v62, %v61
    %v76 = vpack.c.b16 %v64, %v63
    %v77 = vpack.c.b16 %v66, %v65
    %v78 = vpack.c.b16 %v68, %v67
    %v79 = vpack.c.b16 %v70, %v69
    %v80 = vpack.c.b16 %v72, %v71
    %v83 = vunpack.c.l.b16 %v32
    %v84 = vunpack.c.l.b16 %v33
    %v85 = vpack.c.b16 %v84, %v83
    %vm87 = vcmask 130048
    %v89 = vsel %vm87, %v73, 0
    %v92 = vsel %vm87, %v74, 0
    %v95 = vsel %vm87, %v75, 0
    %v98 = vsel %vm87, %v76, 0
    %v101 = vsel %vm87, %v77, 0
    %v104 = vsel %vm87, %v78, 0
    %v107 = vsel %vm87, %v79, 0
    %v110 = vsel %vm87, %v80, 0
    %112 = vmatprep.subr.bf16.mxu0 0
    %113 = vmatpush1.bf16.msra.mxu0 %v85
    %114 = vmatprep.subr.bf16.mxu0 0
    %115 = vmatpush1.bf16.msra.mxu0 0
    %116 = vmatprep.subr.bf16.mxu0 0
    %117 = vmatpush1.bf16.msra.mxu0 0
    %118 = vmatprep.subr.bf16.mxu0 0
    %119 = vmatpush1.bf16.msra.mxu0 0
    %120 = vmatprep.subr.bf16.mxu0 0
    %121 = vmatpush1.bf16.msra.mxu0 0
    %122 = vmatprep.subr.bf16.mxu0 0
    %123 = vmatpush1.bf16.msra.mxu0 0
    %124 = vmatprep.subr.bf16.mxu0 0
    %125 = vmatpush1.bf16.msra.mxu0 0
    %126 = vmatprep.subr.bf16.mxu0 0
    %127 = vmatpush1.bf16.msra.mxu0 0
    %128 = vmatprep.subr.bf16.mxu0 0
    %129 = vmatpush1.bf16.msra.mxu0 0
    %130 = vmatprep.subr.bf16.mxu0 0
    %131 = vmatpush1.bf16.msra.mxu0 0
    %132 = vmatprep.subr.bf16.mxu0 0
    %133 = vmatpush1.bf16.msra.mxu0 0
    %134 = vmatprep.subr.bf16.mxu0 0
    %135 = vmatpush1.bf16.msra.mxu0 0
    %136 = vmatprep.subr.bf16.mxu0 0
    %137 = vmatpush1.bf16.msra.mxu0 0
    %138 = vmatprep.subr.bf16.mxu0 0
    %139 = vmatpush1.bf16.msra.mxu0 0
    %140 = vmatprep.subr.bf16.mxu0 0
    %141 = vmatpush1.bf16.msra.mxu0 0
    %142 = vmatprep.subr.bf16.mxu0 0
    %143 = vmatpush1.bf16.msra.mxu0 0
    %144 = vmatprep.mubr.bf16.mxu0 0
    %145 = vmatmul.mubr.bf16.gmra.mrb[0].mxu0 %v89
    %v146 = vpop.f32.mrb[0].mxu0
    %v147 = vadd.f32 %v39, %v146
    %v148 = vpop.f32.mrb[0].mxu0
    %v149 = vpop.f32.mrb[0].mxu0
    %v150 = vadd.f32 %v39, %v149
    %v151 = vpop.f32.mrb[0].mxu0
    %152 = vmatprep.mubr.bf16.mxu0 0
    %153 = vmatmul.mubr.bf16.gmra.mrb[0].mxu0 %v92
    %v154 = vpop.f32.mrb[0].mxu0
    %v155 = vadd.f32 %v39, %v154
    %v156 = vpop.f32.mrb[0].mxu0
    %v157 = vpop.f32.mrb[0].mxu0
    %v158 = vadd.f32 %v39, %v157
    %v159 = vpop.f32.mrb[0].mxu0
    %160 = vmatprep.mubr.bf16.mxu0 0
    %161 = vmatmul.mubr.bf16.gmra.mrb[0].mxu0 %v95
    %v162 = vpop.f32.mrb[0].mxu0
    %v163 = vadd.f32 %v39, %v162
    %v164 = vpop.f32.mrb[0].mxu0
    %v165 = vpop.f32.mrb[0].mxu0
    %v166 = vadd.f32 %v39, %v165
    %v167 = vpop.f32.mrb[0].mxu0
    %168 = vmatprep.mubr.bf16.mxu0 0
    %169 = vmatmul.mubr.bf16.gmra.mrb[0].mxu0 %v98
    %v170 = vpop.f32.mrb[0].mxu0
    %v171 = vadd.f32 %v39, %v170
    %v172 = vpop.f32.mrb[0].mxu0
    %v173 = vpop.f32.mrb[0].mxu0
    %v174 = vadd.f32 %v39, %v173
    %v175 = vpop.f32.mrb[0].mxu0
    %176 = vmatprep.mubr.bf16.mxu0 0
    %177 = vmatmul.mubr.bf16.gmra.mrb[0].mxu0 %v101
    %v178 = vpop.f32.mrb[0].mxu0
    %v179 = vadd.f32 %v39, %v178
    %v180 = vpop.f32.mrb[0].mxu0
    %v181 = vpop.f32.mrb[0].mxu0
    %v182 = vadd.f32 %v39, %v181
    %v183 = vpop.f32.mrb[0].mxu0
    %184 = vmatprep.mubr.bf16.mxu0 0
    %185 = vmatmul.mubr.bf16.gmra.mrb[0].mxu0 %v104
    %v186 = vpop.f32.mrb[0].mxu0
    %v187 = vadd.f32 %v39, %v186
    %v188 = vpop.f32.mrb[0].mxu0
    %v189 = vpop.f32.mrb[0].mxu0
    %v190 = vadd.f32 %v39, %v189
    %v191 = vpop.f32.mrb[0].mxu0
    %192 = vmatprep.mubr.bf16.mxu0 0
    %193 = vmatmul.mubr.bf16.gmra.mrb[0].mxu0 %v107
    %v194 = vpop.f32.mrb[0].mxu0
    %v195 = vadd.f32 %v39, %v194
    %v196 = vpop.f32.mrb[0].mxu0
    %v197 = vpop.f32.mrb[0].mxu0
    %v198 = vadd.f32 %v39, %v197
    %v199 = vpop.f32.mrb[0].mxu0
    %200 = vmatprep.mubr.bf16.mxu0 0
    %201 = vmatmul.mubr.bf16.gmra.mrb[0].mxu0 %v110
    %v202 = vpop.f32.mrb[0].mxu0
    %v203 = vadd.f32 %v39, %v202
    %v204 = vpop.f32.mrb[0].mxu0
    %v205 = vpop.f32.mrb[0].mxu0
    %v206 = vadd.f32 %v39, %v205
    %v207 = vpop.f32.mrb[0].mxu0
    %208 = vdwg.mxu0
    %v209 = vpack.c.bf16 %v150, %v147
    %v210 = vpack.c.bf16 %v158, %v155
    %v211 = vpack.c.bf16 %v166, %v163
    %v212 = vpack.c.bf16 %v174, %v171
    %v213 = vpack.c.bf16 %v182, %v179
    %v214 = vpack.c.bf16 %v190, %v187
    %v215 = vpack.c.bf16 %v198, %v195
    %v216 = vpack.c.bf16 %v206, %v203
    %v225 = vunpack.c.l.b16 %v209
    %v226 = vunpack.c.h.b16 %v209
    %v227 = vunpack.c.l.b16 %v210
    %v228 = vunpack.c.h.b16 %v210
    %v229 = vunpack.c.l.b16 %v211
    %v230 = vunpack.c.h.b16 %v211
    %v231 = vunpack.c.l.b16 %v212
    %v232 = vunpack.c.h.b16 %v212
    %v233 = vunpack.c.l.b16 %v213
    %v234 = vunpack.c.h.b16 %v213
    %v235 = vunpack.c.l.b16 %v214
    %v236 = vunpack.c.h.b16 %v214
    %v237 = vunpack.c.l.b16 %v215
    %v238 = vunpack.c.h.b16 %v215
    %v239 = vunpack.c.l.b16 %v216
    %v240 = vunpack.c.h.b16 %v216
    %v241 = vpack.c.b16 %v225, %v225
    %v242 = vpack.c.b16 %v226, %v226
    %v243 = vpack.c.b16 %v227, %v227
    %v244 = vpack.c.b16 %v228, %v228
    %v245 = vpack.c.b16 %v229, %v229
    %v246 = vpack.c.b16 %v230, %v230
    %v247 = vpack.c.b16 %v231, %v231
    %v248 = vpack.c.b16 %v232, %v232
    %v249 = vpack.c.b16 %v233, %v233
    %v250 = vpack.c.b16 %v234, %v234
    %v251 = vpack.c.b16 %v235, %v235
    %v252 = vpack.c.b16 %v236, %v236
    %v253 = vpack.c.b16 %v237, %v237
    %v254 = vpack.c.b16 %v238, %v238
    %v255 = vpack.c.b16 %v239, %v239
    %v256 = vpack.c.b16 %v240, %v240
    %273 = vst [vmem:[#allocation2] sm:$0xf] %v241
    %274 = vst [vmem:[#allocation2 + $0x4] sm:$0xf] %v242
    %275 = vst [vmem:[#allocation2 + $0x8] sm:$0xf] %v243
    %276 = vst [vmem:[#allocation2 + $0xc] sm:$0xf] %v244
    %277 = vst [vmem:[#allocation2 + $0x10] sm:$0xf] %v245
    %278 = vst [vmem:[#allocation2 + $0x14] sm:$0xf] %v246
    %279 = vst [vmem:[#allocation2 + $0x18] sm:$0xf] %v247
    %280 = vst [vmem:[#allocation2 + $0x1c] sm:$0xf] %v248
    %281 = vst [vmem:[#allocation2 + $0x20] sm:$0xf] %v249
    %282 = vst [vmem:[#allocation2 + $0x24] sm:$0xf] %v250
    %283 = vst [vmem:[#allocation2 + $0x28] sm:$0xf] %v251
    %284 = vst [vmem:[#allocation2 + $0x2c] sm:$0xf] %v252
    %285 = vst [vmem:[#allocation2 + $0x30] sm:$0xf] %v253
    %286 = vst [vmem:[#allocation2 + $0x34] sm:$0xf] %v254
    %287 = vst [vmem:[#allocation2 + $0x38] sm:$0xf] %v255
    %288 = vst [vmem:[#allocation2 + $0x3c] sm:$0xf] %v256
    // Predicated region
    $region14: #{patch_merging_forward.1} parent=1 // pred_check
      _
    $region15: #{patch_merging_forward.1} parent=1 // pred_check_branch
      %290 = sbr.rel (0) target = $region17
    $region16: #{patch_merging_forward.1} parent=1 // pred_region
      %s292 = ssub.s32 1024, 1024
      %293 = vsyncadd [#allocation3], %s292
      %s294 = sshll.u32 [#allocation2], 4
      %s295 = int_to_ptr.vmem [resolvable:$true] %s294
      %300 = dma.vmem_to_hbm [thread:$0]  %s295, 1024, %s3, [#allocation3], 64, 64, 4
    $region17: #{patch_merging_forward.1} parent=1 // pred_fallthru
      _
    // Predicated region
    $region18: #{patch_merging_forward.1} parent=1 // pred_check
      _
    $region19: #{patch_merging_forward.1} parent=1 // pred_check_branch
      %302 = sbr.rel (0) target = $region21
    $region20: #{patch_merging_forward.1} parent=1 // pred_region
      %303 = dma.done [#allocation3], 1024
    $region21: #{patch_merging_forward.1} parent=1 // pred_fallthru
      _
    %304 = vsyncpa [#allocation3], 1

</llo_original>
